<compile_context>
chip_gen: v7x
topology: tpu7x:2x2x1
jax: 0.10.0
libtpu: 0.0.40
codegen_flags: <defaults>
</compile_context>

<pallas_src>
import functools

import jax
import jax.numpy as jnp
from jax.experimental import pallas as pl
from jax.experimental.pallas import tpu as pltpu

_K = 9            # pooling kernel size
_PAD = 4          # pooling padding (stride 1 -> "same" spatial size)
_NEG_INF = float("-inf")


def _sparse_min_pool_kernel(xmax_ref, x_ref, o_ref, *, h, w):
    """One grid step: a (TB, L) slab; each sublane row is one flattened plane."""
    xm = xmax_ref[0]
    x = x_ref[...]                                   # (TB, L_pad)
    l_pad = x.shape[-1]

    # where(x > 0, x_max - x, 0)
    t = jnp.where(x > 0, xm - x, 0.0)

    # Per-lane coordinates, computed once per grid step on a single (1, L)
    # row; the selects below broadcast them across sublanes (planes).
    lane = jax.lax.broadcasted_iota(jnp.int32, (1, l_pad), 1)
    col = lane % w                                   # column within the image row

    def sliding_max9(v, step, idx, limit, scale):
        """Centered 9-tap max along lanes in units of `step` lanes.

        A value shifted by distance d (in units) is valid iff the destination
        satisfies  idx < (limit - d) * scale   (d > 0)
                   idx >= (-d) * scale         (d < 0)
        which confines every window to its own image row / plane (so the
        cyclic roll never leaks values across rows, planes or lane padding).
        """
        def sh(val, d):
            r = pltpu.roll(val, shift=(-d * step) % l_pad, axis=1)
            ok = (idx < (limit - d) * scale) if d > 0 else (idx >= (-d) * scale)
            return jnp.where(ok, r, _NEG_INF)

        f = jnp.maximum(v, sh(v, 1))      # covers i .. i+1
        f = jnp.maximum(f, sh(f, 2))      # covers i .. i+3
        f = jnp.maximum(f, sh(v, 4))      # covers i .. i+4
        b = jnp.maximum(v, sh(v, -1))     # covers i-1 .. i
        b = jnp.maximum(b, sh(b, -2))     # covers i-3 .. i
        b = jnp.maximum(b, sh(v, -4))     # covers i-4 .. i
        return jnp.maximum(f, b)          # covers i-4 .. i+4

    # Vertical pass: shifts by whole image rows (w lanes), windows confined to
    # the plane.  Horizontal pass: 1-lane shifts, windows confined to the row.
    pooled = sliding_max9(t, step=w, idx=lane, limit=h, scale=w)
    pooled = sliding_max9(pooled, step=1, idx=col, limit=w, scale=1)

    # where(pooled > 0, x_max - pooled, 0)
    o_ref[...] = jnp.where(pooled > 0, xm - pooled, 0.0).astype(o_ref.dtype)


def _pick_tb(p, row_bytes, block_budget):
    """Planes per block: multiple of 8 (or == P), sized to ~block_budget bytes."""
    cap = max(1, block_budget // row_bytes)
    if p <= 8:
        return p
    if cap >= p:
        # Everything fits in one block; still split in two so the "parallel"
        # grid axis can shard across both TensorCores (v7x megacore) when
        # there is enough work to matter.
        if p >= 16 and p * row_bytes >= (256 << 10):
            return ((p + 15) // 16) * 8
        return p
    tb = max(8, (cap // 8) * 8)
    if tb >= p:
        return p
    # Prefer a multiple-of-8 divisor of P within ~25% of the budget-optimal TB
    # so there is no ragged tail block.
    lo = max(8, (int(tb * 0.75) // 8) * 8)
    for cand in range(tb, lo - 1, -8):
        if p % cand == 0:
            return cand
    return tb


def sparse_min_pooling(x, *, block_budget_bytes=2 << 20,
                       vmem_limit_bytes=36 * 1024 * 1024):
    """x: (N, C, H, W) -> (N, C, H, W); same semantics as the torch module."""
    n, c, h, w = x.shape
    p = n * c
    l = h * w
    dtype = x.dtype
    itemsize = jnp.dtype(dtype).itemsize

    # Global max: fused XLA reduce in the wrapper, passed as an SMEM scalar.
    xmax = jnp.max(x).reshape(1)

    # Free, contiguous reshape: planes on the sublane axis, flattened H*W on
    # the lane axis.  No transposes, no extra HBM passes.
    xr = x.reshape(p, l)

    # Keep the lane axis 128-aligned: dense (unmasked) vector stores and
    # aligned XLU rotates.  Padding lanes never feed valid outputs (the edge
    # masks confine every window to its own image row / plane).
    l_pad = -(-l // 128) * 128
    if l_pad != l:
        # TODO(synk): fold this pad into the kernel via a strided DMA from a
        # memory_space=pl.ANY input to avoid the extra HBM pass when H*W is
        # not a multiple of 128.
        xr = jnp.pad(xr, ((0, 0), (0, l_pad - l)))

    row_bytes = l_pad * itemsize
    tb = _pick_tb(p, row_bytes, block_budget_bytes)
    g = -(-p // tb)     # ragged last block is fine: OOB rows are never written
    # TODO(synk): for very large single planes (8 * row_bytes >> budget), tile
    # H into row strips with a 4-row halo instead of whole-plane rows.

    out = pl.pallas_call(
        functools.partial(_sparse_min_pool_kernel, h=h, w=w),
        grid=(g,),
        in_specs=[
            pl.BlockSpec(memory_space=pltpu.SMEM),            # x_max scalar
            pl.BlockSpec((tb, l_pad), lambda i: (i, 0)),      # plane slab
        ],
        out_specs=pl.BlockSpec((tb, l_pad), lambda i: (i, 0)),
        out_shape=jax.ShapeDtypeStruct((p, l_pad), dtype),
        compiler_params=pltpu.CompilerParams(
            dimension_semantics=("parallel",),
            vmem_limit_bytes=vmem_limit_bytes,
        ),
    )(xmax, xr)

    if l_pad != l:
        out = out[:, :l]
    return out.reshape(n, c, h, w)


def _reference(x):
    """Pure-JAX reference mirroring the PyTorch module."""
    xm = jnp.max(x)
    t = jnp.where(x > 0, xm - x, jnp.zeros_like(x))
    t_p = jnp.pad(t, ((0, 0), (0, 0), (_PAD, _PAD), (_PAD, _PAD)),
                  constant_values=-jnp.inf)
    pooled = jax.lax.reduce_window(t_p, -jnp.inf, jax.lax.max,
                                   (1, 1, _K, _K), (1, 1, 1, 1), "VALID")
    return jnp.where(pooled > 0, xm - pooled, jnp.zeros_like(pooled))


if __name__ == "__main__":
    key = jax.random.PRNGKey(0)

    # Primary shape, odd/unaligned spatial dims (lane-pad path), odd plane
    # count, and a tiny block budget forcing a multi-step (ragged) grid.
    cases = [
        ((2, 4, 16, 16), {}),
        ((1, 3, 20, 24), {}),
        ((5, 7, 16, 16), {}),
        ((5, 7, 16, 16), {"block_budget_bytes": 8 * 1024}),
    ]
    for i, (shape, kwargs) in enumerate(cases):
        k = jax.random.fold_in(key, i)
        x = jax.random.normal(k, shape, dtype=jnp.float32)
        x = jnp.where(x < 0.2, jnp.zeros_like(x), x)     # sparse-ish, has zeros

        y = jax.block_until_ready(sparse_min_pooling(x, **kwargs))
        y_ref = jax.block_until_ready(_reference(x))

        assert y.shape == x.shape and y.dtype == x.dtype
        assert jnp.allclose(y, y_ref, atol=1e-6, rtol=1e-6), f"mismatch for {shape}"

    print("KERNEL_OK")
</pallas_src>

<mosaic_0001>
module attributes {stable_mosaic.version = 11 : i64} {
  func.func @_sparse_min_pool_kernel(%arg0: i32, %arg1: memref<1xf32, #tpu.memory_space<smem>>, %arg2: memref<8x256xf32, #tpu.memory_space<vmem>>, %arg3: memref<8x256xf32, #tpu.memory_space<vmem>>) attributes {dimension_semantics = [#tpu.dimension_semantics<parallel>], iteration_bounds = array<i64: 1>, scalar_prefetch = 0 : i64, scratch_operands = 0 : i64, tpu.core_type = #tpu.core_type<tc>, window_params = [{transform_indices = @transform_0, window_bounds = array<i64: 1>}, {transform_indices = @transform_1, window_bounds = array<i64: 8, 256>}, {transform_indices = @transform_2, window_bounds = array<i64: 8, 256>}]} {
    %c0 = arith.constant 0 : index
    %0 = memref.load %arg1[%c0] : memref<1xf32, #tpu.memory_space<smem>>
    %c0_0 = arith.constant 0 : index
    %c0_1 = arith.constant 0 : index
    %1 = vector.load %arg2[%c0_0, %c0_1] : memref<8x256xf32, #tpu.memory_space<vmem>>, vector<8x256xf32>
    %cst = arith.constant 0.000000e+00 : f32
    %2 = vector.broadcast %cst : f32 to vector<8x256xf32>
    %3 = arith.cmpf ogt, %1, %2 : vector<8x256xf32>
    %4 = vector.broadcast %0 : f32 to vector<8x256xf32>
    %5 = arith.subf %4, %1 : vector<8x256xf32>
    %cst_2 = arith.constant 0.000000e+00 : f32
    %6 = vector.broadcast %cst_2 : f32 to vector<8x256xf32>
    %7 = arith.select %3, %5, %6 : vector<8x256xi1>, vector<8x256xf32>
    %8 = tpu.iota {dimensions = array<i32: 1>} : vector<1x256xi32>
    %c16_i32 = arith.constant 16 : i32
    %c0_i32 = arith.constant 0 : i32
    %9 = arith.cmpi eq, %c16_i32, %c0_i32 : i32
    %c1_i32 = arith.constant 1 : i32
    %10 = arith.select %9, %c1_i32, %c16_i32 : i32
    %11 = vector.broadcast %10 : i32 to vector<1x256xi32>
    %12 = arith.remsi %8, %11 : vector<1x256xi32>
    %c0_i32_3 = arith.constant 0 : i32
    %13 = vector.broadcast %c0_i32_3 : i32 to vector<1x256xi32>
    %14 = arith.cmpi ne, %12, %13 : vector<1x256xi32>
    %c0_i32_4 = arith.constant 0 : i32
    %15 = vector.broadcast %c0_i32_4 : i32 to vector<1x256xi32>
    %16 = arith.cmpi slt, %12, %15 : vector<1x256xi32>
    %c0_i32_5 = arith.constant 0 : i32
    %17 = arith.cmpi slt, %10, %c0_i32_5 : i32
    %18 = vector.broadcast %17 : i1 to vector<1x256xi1>
    %19 = vector.broadcast %18 : vector<1x256xi1> to vector<1x256xi1>
    %20 = arith.xori %16, %19 : vector<1x256xi1>
    %21 = arith.andi %20, %14 : vector<1x256xi1>
    %22 = vector.broadcast %10 : i32 to vector<1x256xi32>
    %23 = arith.addi %12, %22 : vector<1x256xi32>
    %24 = arith.select %21, %23, %12 : vector<1x256xi1>, vector<1x256xi32>
    %c240_i32 = arith.constant 240 : i32
    %25 = tpu.dynamic_rotate %7 by %c240_i32 dim 1 : vector<8x256xf32>, i32 -> vector<8x256xf32>
    %c240_i32_6 = arith.constant 240 : i32
    %26 = vector.broadcast %c240_i32_6 : i32 to vector<1x256xi32>
    %27 = arith.cmpi slt, %8, %26 : vector<1x256xi32>
    %cst_7 = arith.constant 0xFF800000 : f32
    %28 = vector.shape_cast %27 : vector<1x256xi1> to vector<1x256xi1>
    %29 = vector.broadcast %28 : vector<1x256xi1> to vector<8x256xi1>
    %30 = vector.broadcast %cst_7 : f32 to vector<8x256xf32>
    %31 = arith.select %29, %25, %30 : vector<8x256xi1>, vector<8x256xf32>
    %32 = arith.maximumf %7, %31 : vector<8x256xf32>
    %c224_i32 = arith.constant 224 : i32
    %33 = tpu.dynamic_rotate %32 by %c224_i32 dim 1 : vector<8x256xf32>, i32 -> vector<8x256xf32>
    %c224_i32_8 = arith.constant 224 : i32
    %34 = vector.broadcast %c224_i32_8 : i32 to vector<1x256xi32>
    %35 = arith.cmpi slt, %8, %34 : vector<1x256xi32>
    %cst_9 = arith.constant 0xFF800000 : f32
    %36 = vector.shape_cast %35 : vector<1x256xi1> to vector<1x256xi1>
    %37 = vector.broadcast %36 : vector<1x256xi1> to vector<8x256xi1>
    %38 = vector.broadcast %cst_9 : f32 to vector<8x256xf32>
    %39 = arith.select %37, %33, %38 : vector<8x256xi1>, vector<8x256xf32>
    %40 = arith.maximumf %32, %39 : vector<8x256xf32>
    %c192_i32 = arith.constant 192 : i32
    %41 = tpu.dynamic_rotate %7 by %c192_i32 dim 1 : vector<8x256xf32>, i32 -> vector<8x256xf32>
    %c192_i32_10 = arith.constant 192 : i32
    %42 = vector.broadcast %c192_i32_10 : i32 to vector<1x256xi32>
    %43 = arith.cmpi slt, %8, %42 : vector<1x256xi32>
    %cst_11 = arith.constant 0xFF800000 : f32
    %44 = vector.shape_cast %43 : vector<1x256xi1> to vector<1x256xi1>
    %45 = vector.broadcast %44 : vector<1x256xi1> to vector<8x256xi1>
    %46 = vector.broadcast %cst_11 : f32 to vector<8x256xf32>
    %47 = arith.select %45, %41, %46 : vector<8x256xi1>, vector<8x256xf32>
    %48 = arith.maximumf %40, %47 : vector<8x256xf32>
    %c16_i32_12 = arith.constant 16 : i32
    %49 = tpu.dynamic_rotate %7 by %c16_i32_12 dim 1 : vector<8x256xf32>, i32 -> vector<8x256xf32>
    %c16_i32_13 = arith.constant 16 : i32
    %50 = vector.broadcast %c16_i32_13 : i32 to vector<1x256xi32>
    %51 = arith.cmpi sge, %8, %50 : vector<1x256xi32>
    %cst_14 = arith.constant 0xFF800000 : f32
    %52 = vector.shape_cast %51 : vector<1x256xi1> to vector<1x256xi1>
    %53 = vector.broadcast %52 : vector<1x256xi1> to vector<8x256xi1>
    %54 = vector.broadcast %cst_14 : f32 to vector<8x256xf32>
    %55 = arith.select %53, %49, %54 : vector<8x256xi1>, vector<8x256xf32>
    %56 = arith.maximumf %7, %55 : vector<8x256xf32>
    %c32_i32 = arith.constant 32 : i32
    %57 = tpu.dynamic_rotate %56 by %c32_i32 dim 1 : vector<8x256xf32>, i32 -> vector<8x256xf32>
    %c32_i32_15 = arith.constant 32 : i32
    %58 = vector.broadcast %c32_i32_15 : i32 to vector<1x256xi32>
    %59 = arith.cmpi sge, %8, %58 : vector<1x256xi32>
    %cst_16 = arith.constant 0xFF800000 : f32
    %60 = vector.shape_cast %59 : vector<1x256xi1> to vector<1x256xi1>
    %61 = vector.broadcast %60 : vector<1x256xi1> to vector<8x256xi1>
    %62 = vector.broadcast %cst_16 : f32 to vector<8x256xf32>
    %63 = arith.select %61, %57, %62 : vector<8x256xi1>, vector<8x256xf32>
    %64 = arith.maximumf %56, %63 : vector<8x256xf32>
    %c64_i32 = arith.constant 64 : i32
    %65 = tpu.dynamic_rotate %7 by %c64_i32 dim 1 : vector<8x256xf32>, i32 -> vector<8x256xf32>
    %c64_i32_17 = arith.constant 64 : i32
    %66 = vector.broadcast %c64_i32_17 : i32 to vector<1x256xi32>
    %67 = arith.cmpi sge, %8, %66 : vector<1x256xi32>
    %cst_18 = arith.constant 0xFF800000 : f32
    %68 = vector.shape_cast %67 : vector<1x256xi1> to vector<1x256xi1>
    %69 = vector.broadcast %68 : vector<1x256xi1> to vector<8x256xi1>
    %70 = vector.broadcast %cst_18 : f32 to vector<8x256xf32>
    %71 = arith.select %69, %65, %70 : vector<8x256xi1>, vector<8x256xf32>
    %72 = arith.maximumf %64, %71 : vector<8x256xf32>
    %73 = arith.maximumf %48, %72 : vector<8x256xf32>
    %c255_i32 = arith.constant 255 : i32
    %74 = tpu.dynamic_rotate %73 by %c255_i32 dim 1 : vector<8x256xf32>, i32 -> vector<8x256xf32>
    %c15_i32 = arith.constant 15 : i32
    %75 = vector.broadcast %c15_i32 : i32 to vector<1x256xi32>
    %76 = arith.cmpi slt, %24, %75 : vector<1x256xi32>
    %cst_19 = arith.constant 0xFF800000 : f32
    %77 = vector.shape_cast %76 : vector<1x256xi1> to vector<1x256xi1>
    %78 = vector.broadcast %77 : vector<1x256xi1> to vector<8x256xi1>
    %79 = vector.broadcast %cst_19 : f32 to vector<8x256xf32>
    %80 = arith.select %78, %74, %79 : vector<8x256xi1>, vector<8x256xf32>
    %81 = arith.maximumf %73, %80 : vector<8x256xf32>
    %c254_i32 = arith.constant 254 : i32
    %82 = tpu.dynamic_rotate %81 by %c254_i32 dim 1 : vector<8x256xf32>, i32 -> vector<8x256xf32>
    %c14_i32 = arith.constant 14 : i32
    %83 = vector.broadcast %c14_i32 : i32 to vector<1x256xi32>
    %84 = arith.cmpi slt, %24, %83 : vector<1x256xi32>
    %cst_20 = arith.constant 0xFF800000 : f32
    %85 = vector.shape_cast %84 : vector<1x256xi1> to vector<1x256xi1>
    %86 = vector.broadcast %85 : vector<1x256xi1> to vector<8x256xi1>
    %87 = vector.broadcast %cst_20 : f32 to vector<8x256xf32>
    %88 = arith.select %86, %82, %87 : vector<8x256xi1>, vector<8x256xf32>
    %89 = arith.maximumf %81, %88 : vector<8x256xf32>
    %c252_i32 = arith.constant 252 : i32
    %90 = tpu.dynamic_rotate %73 by %c252_i32 dim 1 : vector<8x256xf32>, i32 -> vector<8x256xf32>
    %c12_i32 = arith.constant 12 : i32
    %91 = vector.broadcast %c12_i32 : i32 to vector<1x256xi32>
    %92 = arith.cmpi slt, %24, %91 : vector<1x256xi32>
    %cst_21 = arith.constant 0xFF800000 : f32
    %93 = vector.shape_cast %92 : vector<1x256xi1> to vector<1x256xi1>
    %94 = vector.broadcast %93 : vector<1x256xi1> to vector<8x256xi1>
    %95 = vector.broadcast %cst_21 : f32 to vector<8x256xf32>
    %96 = arith.select %94, %90, %95 : vector<8x256xi1>, vector<8x256xf32>
    %97 = arith.maximumf %89, %96 : vector<8x256xf32>
    %c1_i32_22 = arith.constant 1 : i32
    %98 = tpu.dynamic_rotate %73 by %c1_i32_22 dim 1 : vector<8x256xf32>, i32 -> vector<8x256xf32>
    %c1_i32_23 = arith.constant 1 : i32
    %99 = vector.broadcast %c1_i32_23 : i32 to vector<1x256xi32>
    %100 = arith.cmpi sge, %24, %99 : vector<1x256xi32>
    %cst_24 = arith.constant 0xFF800000 : f32
    %101 = vector.shape_cast %100 : vector<1x256xi1> to vector<1x256xi1>
    %102 = vector.broadcast %101 : vector<1x256xi1> to vector<8x256xi1>
    %103 = vector.broadcast %cst_24 : f32 to vector<8x256xf32>
    %104 = arith.select %102, %98, %103 : vector<8x256xi1>, vector<8x256xf32>
    %105 = arith.maximumf %73, %104 : vector<8x256xf32>
    %c2_i32 = arith.constant 2 : i32
    %106 = tpu.dynamic_rotate %105 by %c2_i32 dim 1 : vector<8x256xf32>, i32 -> vector<8x256xf32>
    %c2_i32_25 = arith.constant 2 : i32
    %107 = vector.broadcast %c2_i32_25 : i32 to vector<1x256xi32>
    %108 = arith.cmpi sge, %24, %107 : vector<1x256xi32>
    %cst_26 = arith.constant 0xFF800000 : f32
    %109 = vector.shape_cast %108 : vector<1x256xi1> to vector<1x256xi1>
    %110 = vector.broadcast %109 : vector<1x256xi1> to vector<8x256xi1>
    %111 = vector.broadcast %cst_26 : f32 to vector<8x256xf32>
    %112 = arith.select %110, %106, %111 : vector<8x256xi1>, vector<8x256xf32>
    %113 = arith.maximumf %105, %112 : vector<8x256xf32>
    %c4_i32 = arith.constant 4 : i32
    %114 = tpu.dynamic_rotate %73 by %c4_i32 dim 1 : vector<8x256xf32>, i32 -> vector<8x256xf32>
    %c4_i32_27 = arith.constant 4 : i32
    %115 = vector.broadcast %c4_i32_27 : i32 to vector<1x256xi32>
    %116 = arith.cmpi sge, %24, %115 : vector<1x256xi32>
    %cst_28 = arith.constant 0xFF800000 : f32
    %117 = vector.shape_cast %116 : vector<1x256xi1> to vector<1x256xi1>
    %118 = vector.broadcast %117 : vector<1x256xi1> to vector<8x256xi1>
    %119 = vector.broadcast %cst_28 : f32 to vector<8x256xf32>
    %120 = arith.select %118, %114, %119 : vector<8x256xi1>, vector<8x256xf32>
    %121 = arith.maximumf %113, %120 : vector<8x256xf32>
    %122 = arith.maximumf %97, %121 : vector<8x256xf32>
    %cst_29 = arith.constant 0.000000e+00 : f32
    %123 = vector.broadcast %cst_29 : f32 to vector<8x256xf32>
    %124 = arith.cmpf ogt, %122, %123 : vector<8x256xf32>
    %125 = vector.broadcast %0 : f32 to vector<8x256xf32>
    %126 = arith.subf %125, %122 : vector<8x256xf32>
    %cst_30 = arith.constant 0.000000e+00 : f32
    %127 = vector.broadcast %cst_30 : f32 to vector<8x256xf32>
    %128 = arith.select %124, %126, %127 : vector<8x256xi1>, vector<8x256xf32>
    %c0_31 = arith.constant 0 : index
    %c0_32 = arith.constant 0 : index
    %129 = vector.load %arg3[%c0_31, %c0_32] : memref<8x256xf32, #tpu.memory_space<vmem>>, vector<8x256xf32>
    tpu.vector_store %arg3[%c0_31, %c0_32], %128 {strides = array<i32>} : memref<8x256xf32, #tpu.memory_space<vmem>>, vector<8x256xf32>,
    return
  }
  func.func @transform_0(%arg0: i32) -> i32 {
    %c0_i32 = arith.constant 0 : i32
    %c0_i32_0 = arith.constant 0 : i32
    return %c0_i32 : i32
  }
  func.func @transform_1(%arg0: i32) -> (i32, i32) {
    %c0_i32 = arith.constant 0 : i32
    %c0_i32_0 = arith.constant 0 : i32
    return %arg0, %c0_i32 : i32, i32
  }
  func.func @transform_2(%arg0: i32) -> (i32, i32) {
    %c0_i32 = arith.constant 0 : i32
    %c0_i32_0 = arith.constant 0 : i32
    return %arg0, %c0_i32 : i32, i32
  }
}

</mosaic_0001>

<llo_original>
// kernel: tpu_custom_call.1
$region0: #{tpu_custom_call.1}
  #allocation0 [shape = 'u32[]', space=smem, size = 0x4, offset = 0x4, fixed_abs, tag = 'smem constant byte address 0x4 - core index']
  #allocation1 [shape = 'u32[144,128]{1,0:T(1,128)}', space=vmem, size = 0x12000, scoped, tag = 'internal scratch']
  #allocation2 [shape = 'f32[1]{0:T(128)S(6)}', space=smem, size = 0x200, scoped, tag = 'scoped memory for tpu_custom_call.1']
  %s0 = inlined_call_operand.<no memory space> [shape: f32[1], index: 0, kind: input, shape index: {}]
  %s1 = inlined_call_operand.hbm [shape: f32[8,256], index: 1, kind: input, shape index: {}]
  %s2 = inlined_call_operand.hbm [shape: f32[8,256], index: 2, kind: output, shape index: {}]
  %s3 = sld [smem:[#allocation0]]
  $region22: #{tpu_custom_call.1} parent=0
    _
  %s5 = ssub.s32 1, %s3
  %s6 = scalar_select 0, %s5, %s3
  %7 = sst [smem:[#allocation2]] %s0
  $region1: #{tpu_custom_call.1} parent=0
    #allocation3 [shape = 'u8[8192]{0}', space=vmem, size = 0x2000, scoped, tag = 'input window, operand 1, single buffered']
    #allocation4 [shape = 's32[1]{0}', space=sflag, size = 0x4, scoped, tag = 'scoped memory for tpu_custom_call.1']
    #allocation5 [shape = 's32[1]{0}', space=sflag, size = 0x4, scoped, tag = 'scoped memory for tpu_custom_call.1']
    #allocation6 [shape = 'u8[8192]{0}', space=vmem, size = 0x2000, scoped, tag = 'output window, operand 0, single buffered']
    %8 = vsyncpa [#allocation4], 0
    %9 = vsyncpa [#allocation5], 0
    // Predicated region
    $region2: #{tpu_custom_call.1} parent=1 // pred_check
      _
    $region3: #{tpu_custom_call.1} parent=1 // pred_check_branch
      %11 = sbr.rel (0) target = $region5
    $region4: #{tpu_custom_call.1} parent=1 // pred_region
      _
    $region5: #{tpu_custom_call.1} parent=1 // pred_fallthru
      _
    // Predicated region
    $region6: #{tpu_custom_call.1} parent=1 // pred_check
      _
    $region7: #{tpu_custom_call.1} parent=1 // pred_check_branch
      %13 = sbr.rel (0) target = $region9
    $region8: #{tpu_custom_call.1} parent=1 // pred_region
      %s15 = ssub.s32 256, 256
      %16 = vsyncadd [#allocation4], %s15
      %s18 = sshll.u32 [#allocation3], 4
      %s19 = int_to_ptr.vmem [resolvable:$true] %s18
      %21 = dma.hbm_to_vmem [thread:$0]  %s1, 256, %s19, [#allocation4]
    $region9: #{tpu_custom_call.1} parent=1 // pred_fallthru
      _
    // Predicated region
    $region10: #{tpu_custom_call.1} parent=1 // pred_check
      _
    $region11: #{tpu_custom_call.1} parent=1 // pred_check_branch
      %23 = sbr.rel (0) target = $region13
    $region12: #{tpu_custom_call.1} parent=1 // pred_region
      %24 = dma.done [#allocation4], 256
    $region13: #{tpu_custom_call.1} parent=1 // pred_fallthru
      _
    %s25 = sld [smem:[#allocation2]]
    %v26 = vld [vmem:[#allocation3] sm:$0xff]
    %v27 = vld [vmem:[#allocation3 + $0x8] sm:$0xff]
    %vm28 = vcmp.gt.f32.partialorder %v26, 0.0
    %vm29 = vcmp.gt.f32.partialorder %v27, 0.0
    %v30 = vstv %s25
    %v31 = vsub.f32 %v30, %v26
    %v32 = vsub.f32 %v30, %v27
    %v33 = vsel %vm28, %v31, 0.0
    %v34 = vsel %vm29, %v32, 0.0
    %v35 = vlaneseq
    %v36 = vand.u32 %v35, 127
    %v37 = vadd.s32 %v36, 128
    %vm38 = vcmp.lt.s32.totalorder %v36, 0
    %v39 = vsub.s32 0, %v36
    %v40 = vsel %vm38, %v39, %v36
    %v41 = vshrl.u32 %v40, 4
    %v42 = vand.u32 %v40, 15
    %v43 = vsub.s32 0, %v42
    %v44 = vsel %vm38, %v43, %v42
    %vm45 = vcmp.lt.s32.totalorder %v37, 0
    %v46 = vsub.s32 0, %v37
    %v47 = vsel %vm45, %v46, %v37
    %v48 = vshrl.u32 %v47, 4
    %v49 = vand.u32 %v47, 15
    %v50 = vsub.s32 0, %v49
    %v51 = vsel %vm45, %v50, %v49
    %vm52 = vcmp.ne.s32.totalorder %v44, 0
    %vm53 = vcmp.ne.s32.totalorder %v51, 0
    %vm54 = vcmp.lt.s32.totalorder %v44, 0
    %vm55 = vcmp.lt.s32.totalorder %v51, 0
    %vm56 = vmand %vm54, %vm52
    %vm57 = vmand %vm55, %vm53
    %v58 = vadd.s32 %v44, 16
    %v59 = vadd.s32 %v51, 16
    %v60 = vsel %vm56, %v58, %v44
    %v61 = vsel %vm57, %v59, %v51
    %62 = vrot.lane.b32.xlu0 %v33, 112
    %v63 = vpop.permute.xlu0 %62
    %64 = vrot.lane.b32.xlu0 %v34, 112
    %v65 = vpop.permute.xlu0 %64
    %vm66 = vcmp.lt.s32.totalorder %v36, 112
    %v67 = vsel %vm66, %v63, %v65
    %v68 = vsel %vm66, %v65, %v63
    %vm69 = vcmp.lt.s32.totalorder %v36, 240
    %vm70 = vcmp.lt.s32.totalorder %v37, 240
    %v71 = vsel %vm69, 1, 0
    %v72 = vsel %vm70, 1, 0
    %vm73 = vcmp.eq.s32.totalorder %v71, 1
    %vm74 = vcmp.eq.s32.totalorder %v72, 1
    %v75 = vsel %vm73, %v67, -inf
    %v76 = vsel %vm74, %v68, -inf
    %v77 = vmax.f32 %v33, %v75
    %v78 = vmax.f32 %v34, %v76
    %79 = vrot.lane.b32.xlu0 %v77, 96
    %v80 = vpop.permute.xlu0 %79
    %81 = vrot.lane.b32.xlu0 %v78, 96
    %v82 = vpop.permute.xlu0 %81
    %vm83 = vcmp.lt.s32.totalorder %v36, 96
    %v84 = vsel %vm83, %v80, %v82
    %v85 = vsel %vm83, %v82, %v80
    %vm86 = vcmp.lt.s32.totalorder %v36, 224
    %vm87 = vcmp.lt.s32.totalorder %v37, 224
    %v88 = vsel %vm86, 1, 0
    %v89 = vsel %vm87, 1, 0
    %vm90 = vcmp.eq.s32.totalorder %v88, 1
    %vm91 = vcmp.eq.s32.totalorder %v89, 1
    %v92 = vsel %vm90, %v84, -inf
    %v93 = vsel %vm91, %v85, -inf
    %v94 = vmax.f32 %v77, %v92
    %v95 = vmax.f32 %v78, %v93
    %96 = vrot.lane.b32.xlu0 %v33, 64
    %v97 = vpop.permute.xlu0 %96
    %98 = vrot.lane.b32.xlu0 %v34, 64
    %v99 = vpop.permute.xlu0 %98
    %vm100 = vcmp.lt.s32.totalorder %v36, 64
    %v101 = vsel %vm100, %v97, %v99
    %v102 = vsel %vm100, %v99, %v97
    %vm103 = vcmp.lt.s32.totalorder %v36, 192
    %vm104 = vcmp.lt.s32.totalorder %v37, 192
    %v105 = vsel %vm103, 1, 0
    %v106 = vsel %vm104, 1, 0
    %vm107 = vcmp.eq.s32.totalorder %v105, 1
    %vm108 = vcmp.eq.s32.totalorder %v106, 1
    %v109 = vsel %vm107, %v101, -inf
    %v110 = vsel %vm108, %v102, -inf
    %v111 = vmax.f32 %v94, %v109
    %v112 = vmax.f32 %v95, %v110
    %113 = vrot.lane.b32.xlu0 %v33, 16
    %v114 = vpop.permute.xlu0 %113
    %115 = vrot.lane.b32.xlu0 %v34, 16
    %v116 = vpop.permute.xlu0 %115
    %vm117 = vcmp.lt.s32.totalorder %v36, 16
    %v118 = vsel %vm117, %v114, %v116
    %v119 = vsel %vm117, %v116, %v114
    %vm120 = vcmp.ge.s32.totalorder %v36, 16
    %vm121 = vcmp.ge.s32.totalorder %v37, 16
    %v122 = vsel %vm120, 1, 0
    %v123 = vsel %vm121, 1, 0
    %vm124 = vcmp.eq.s32.totalorder %v122, 1
    %vm125 = vcmp.eq.s32.totalorder %v123, 1
    %v126 = vsel %vm124, %v119, -inf
    %v127 = vsel %vm125, %v118, -inf
    %v128 = vmax.f32 %v33, %v126
    %v129 = vmax.f32 %v34, %v127
    %130 = vrot.lane.b32.xlu0 %v128, 32
    %v131 = vpop.permute.xlu0 %130
    %132 = vrot.lane.b32.xlu0 %v129, 32
    %v133 = vpop.permute.xlu0 %132
    %vm134 = vcmp.lt.s32.totalorder %v36, 32
    %v135 = vsel %vm134, %v131, %v133
    %v136 = vsel %vm134, %v133, %v131
    %vm137 = vcmp.ge.s32.totalorder %v36, 32
    %vm138 = vcmp.ge.s32.totalorder %v37, 32
    %v139 = vsel %vm137, 1, 0
    %v140 = vsel %vm138, 1, 0
    %vm141 = vcmp.eq.s32.totalorder %v139, 1
    %vm142 = vcmp.eq.s32.totalorder %v140, 1
    %v143 = vsel %vm141, %v136, -inf
    %v144 = vsel %vm142, %v135, -inf
    %v145 = vmax.f32 %v128, %v143
    %v146 = vmax.f32 %v129, %v144
    %vm147 = vcmp.ge.s32.totalorder %v36, 64
    %vm148 = vcmp.ge.s32.totalorder %v37, 64
    %v149 = vsel %vm147, 1, 0
    %v150 = vsel %vm148, 1, 0
    %vm151 = vcmp.eq.s32.totalorder %v149, 1
    %vm152 = vcmp.eq.s32.totalorder %v150, 1
    %v153 = vsel %vm151, %v102, -inf
    %v154 = vsel %vm152, %v101, -inf
    %v155 = vmax.f32 %v145, %v153
    %v156 = vmax.f32 %v146, %v154
    %v157 = vmax.f32 %v111, %v155
    %v158 = vmax.f32 %v112, %v156
    %159 = vrot.lane.b32.xlu0 %v157, 127
    %v160 = vpop.permute.xlu0 %159
    %161 = vrot.lane.b32.xlu0 %v158, 127
    %v162 = vpop.permute.xlu0 %161
    %vm163 = vcmp.lt.s32.totalorder %v36, 127
    %v164 = vsel %vm163, %v160, %v162
    %v165 = vsel %vm163, %v162, %v160
    %vm166 = vcmp.lt.s32.totalorder %v60, 15
    %vm167 = vcmp.lt.s32.totalorder %v61, 15
    %v168 = vsel %vm166, 1, 0
    %v169 = vsel %vm167, 1, 0
    %vm170 = vcmp.eq.s32.totalorder %v168, 1
    %vm171 = vcmp.eq.s32.totalorder %v169, 1
    %v172 = vsel %vm170, %v164, -inf
    %v173 = vsel %vm171, %v165, -inf
    %v174 = vmax.f32 %v157, %v172
    %v175 = vmax.f32 %v158, %v173
    %176 = vrot.lane.b32.xlu0 %v174, 126
    %v177 = vpop.permute.xlu0 %176
    %178 = vrot.lane.b32.xlu0 %v175, 126
    %v179 = vpop.permute.xlu0 %178
    %vm180 = vcmp.lt.s32.totalorder %v36, 126
    %v181 = vsel %vm180, %v177, %v179
    %v182 = vsel %vm180, %v179, %v177
    %vm183 = vcmp.lt.s32.totalorder %v60, 14
    %vm184 = vcmp.lt.s32.totalorder %v61, 14
    %v185 = vsel %vm183, 1, 0
    %v186 = vsel %vm184, 1, 0
    %vm187 = vcmp.eq.s32.totalorder %v185, 1
    %vm188 = vcmp.eq.s32.totalorder %v186, 1
    %v189 = vsel %vm187, %v181, -inf
    %v190 = vsel %vm188, %v182, -inf
    %v191 = vmax.f32 %v174, %v189
    %v192 = vmax.f32 %v175, %v190
    %193 = vrot.lane.b32.xlu0 %v157, 124
    %v194 = vpop.permute.xlu0 %193
    %195 = vrot.lane.b32.xlu0 %v158, 124
    %v196 = vpop.permute.xlu0 %195
    %vm197 = vcmp.lt.s32.totalorder %v36, 124
    %v198 = vsel %vm197, %v194, %v196
    %v199 = vsel %vm197, %v196, %v194
    %vm200 = vcmp.lt.s32.totalorder %v60, 12
    %vm201 = vcmp.lt.s32.totalorder %v61, 12
    %v202 = vsel %vm200, 1, 0
    %v203 = vsel %vm201, 1, 0
    %vm204 = vcmp.eq.s32.totalorder %v202, 1
    %vm205 = vcmp.eq.s32.totalorder %v203, 1
    %v206 = vsel %vm204, %v198, -inf
    %v207 = vsel %vm205, %v199, -inf
    %v208 = vmax.f32 %v191, %v206
    %v209 = vmax.f32 %v192, %v207
    %210 = vrot.lane.b32.xlu0 %v157, 1
    %v211 = vpop.permute.xlu0 %210
    %212 = vrot.lane.b32.xlu0 %v158, 1
    %v213 = vpop.permute.xlu0 %212
    %vm214 = vcmp.lt.s32.totalorder %v36, 1
    %v215 = vsel %vm214, %v211, %v213
    %v216 = vsel %vm214, %v213, %v211
    %vm217 = vcmp.ge.s32.totalorder %v60, 1
    %vm218 = vcmp.ge.s32.totalorder %v61, 1
    %v219 = vsel %vm217, 1, 0
    %v220 = vsel %vm218, 1, 0
    %vm221 = vcmp.eq.s32.totalorder %v219, 1
    %vm222 = vcmp.eq.s32.totalorder %v220, 1
    %v223 = vsel %vm221, %v216, -inf
    %v224 = vsel %vm222, %v215, -inf
    %v225 = vmax.f32 %v157, %v223
    %v226 = vmax.f32 %v158, %v224
    %227 = vrot.lane.b32.xlu0 %v225, 2
    %v228 = vpop.permute.xlu0 %227
    %229 = vrot.lane.b32.xlu0 %v226, 2
    %v230 = vpop.permute.xlu0 %229
    %vm231 = vcmp.lt.s32.totalorder %v36, 2
    %v232 = vsel %vm231, %v228, %v230
    %v233 = vsel %vm231, %v230, %v228
    %vm234 = vcmp.ge.s32.totalorder %v60, 2
    %vm235 = vcmp.ge.s32.totalorder %v61, 2
    %v236 = vsel %vm234, 1, 0
    %v237 = vsel %vm235, 1, 0
    %vm238 = vcmp.eq.s32.totalorder %v236, 1
    %vm239 = vcmp.eq.s32.totalorder %v237, 1
    %v240 = vsel %vm238, %v233, -inf
    %v241 = vsel %vm239, %v232, -inf
    %v242 = vmax.f32 %v225, %v240
    %v243 = vmax.f32 %v226, %v241
    %244 = vrot.lane.b32.xlu0 %v157, 4
    %v245 = vpop.permute.xlu0 %244
    %246 = vrot.lane.b32.xlu0 %v158, 4
    %v247 = vpop.permute.xlu0 %246
    %vm248 = vcmp.lt.s32.totalorder %v36, 4
    %v249 = vsel %vm248, %v245, %v247
    %v250 = vsel %vm248, %v247, %v245
    %vm251 = vcmp.ge.s32.totalorder %v60, 4
    %vm252 = vcmp.ge.s32.totalorder %v61, 4
    %v253 = vsel %vm251, 1, 0
    %v254 = vsel %vm252, 1, 0
    %vm255 = vcmp.eq.s32.totalorder %v253, 1
    %vm256 = vcmp.eq.s32.totalorder %v254, 1
    %v257 = vsel %vm255, %v250, -inf
    %v258 = vsel %vm256, %v249, -inf
    %v259 = vmax.f32 %v242, %v257
    %v260 = vmax.f32 %v243, %v258
    %v261 = vmax.f32 %v208, %v259
    %v262 = vmax.f32 %v209, %v260
    %vm263 = vcmp.gt.f32.partialorder %v261, 0.0
    %vm264 = vcmp.gt.f32.partialorder %v262, 0.0
    %v265 = vsub.f32 %v30, %v261
    %v266 = vsub.f32 %v30, %v262
    %v267 = vsel %vm263, %v265, 0.0
    %v268 = vsel %vm264, %v266, 0.0
    %269 = vst [vmem:[#allocation6] sm:$0xff] %v267
    %270 = vst [vmem:[#allocation6 + $0x8] sm:$0xff] %v268
    // Predicated region
    $region14: #{tpu_custom_call.1} parent=1 // pred_check
      _
    $region15: #{tpu_custom_call.1} parent=1 // pred_check_branch
      %272 = sbr.rel (0) target = $region17
    $region16: #{tpu_custom_call.1} parent=1 // pred_region
      %s274 = ssub.s32 256, 256
      %275 = vsyncadd [#allocation5], %s274
      %s277 = sshll.u32 [#allocation6], 4
      %s278 = int_to_ptr.vmem [resolvable:$true] %s277
      %280 = dma.vmem_to_hbm [thread:$0]  %s278, 256, %s2, [#allocation5]
    $region17: #{tpu_custom_call.1} parent=1 // pred_fallthru
      _
    // Predicated region
    $region18: #{tpu_custom_call.1} parent=1 // pred_check
      _
    $region19: #{tpu_custom_call.1} parent=1 // pred_check_branch
      %282 = sbr.rel (0) target = $region21
    $region20: #{tpu_custom_call.1} parent=1 // pred_region
      %283 = dma.done [#allocation5], 256
    $region21: #{tpu_custom_call.1} parent=1 // pred_fallthru
      _
    %284 = vsyncpa [#allocation4], 1
    %285 = vsyncpa [#allocation5], 1

</llo_original>
